<compile_context>
chip_gen: v6e
topology: v6e:2x2x1
jax: 0.10.0
libtpu: 0.0.40
codegen_flags: <defaults>
</compile_context>

<pallas_src>
import math

import jax
import jax.numpy as jnp
from jax.experimental import pallas as pl
from jax.experimental.pallas import tpu as pltpu

EPS = 1e-12          # F.normalize eps
EPS2 = EPS * EPS


def _round_up(v, m):
    return (v + m - 1) // m * m


def _l2_normalize_rows(w):
    """normalize(w, dim=-1) == w / max(||w||, eps), written with rsqrt."""
    w32 = w.astype(jnp.float32)
    inv = jax.lax.rsqrt(
        jnp.maximum(jnp.sum(w32 * w32, axis=-1, keepdims=True), EPS2))
    return (w32 * inv).astype(w.dtype)


# ---------------------------------------------------------------------------
# Kernel 1: cosine linear  (logits branch, topk_indices is None)
#   out = sigma * (normalize(X, dim=1) @ normalize(W, dim=1).T)
# W is pre-normalized outside the kernel (cached: it is a parameter).
# X's 1/||x|| row factors are precomputed over the FULL feature dim and
# folded into the finalize step, so the reduction (k) axis can be tiled.
# ---------------------------------------------------------------------------
def _cosine_matmul_kernel(sigma_ref, xinv_ref, x_ref, w_ref, out_ref, acc_ref):
    @pl.when(pl.program_id(2) == 0)
    def _init():
        acc_ref[...] = jnp.zeros_like(acc_ref)

    # (tm, tk) x (tn, tk) contracting on the tk axis -> (tm, tn)   (MXU)
    acc_ref[...] += jax.lax.dot_general(
        x_ref[...], w_ref[...],
        dimension_numbers=(((1,), (1,)), ((), ())),
        preferred_element_type=jnp.float32)

    @pl.when(pl.program_id(2) == pl.num_programs(2) - 1)
    def _finalize():
        # sigma and the per-row inverse norms are applied once, here.
        out_ref[...] = (sigma_ref[0] * xinv_ref[...] * acc_ref[...]
                        ).astype(out_ref.dtype)


def cosine_linear(x, weight_normed, sigma, *, tm=256, tn=256, tk=512,
                  compute_dtype=None):
    """sigma * normalize(x) @ weight_normed.T  (weight_normed pre-normalized)."""
    N, D = x.shape
    C, _ = weight_normed.shape
    out_dtype = x.dtype

    # Per-row inverse norms of X over the full feature dim (cheap glue,
    # O(N*D) vs the O(N*C*D) matmul); keeps the tiled reduction correct.
    x32 = x.astype(jnp.float32)
    x_inv = jax.lax.rsqrt(
        jnp.maximum(jnp.sum(x32 * x32, axis=1, keepdims=True), EPS2))

    if compute_dtype is not None:
        x = x.astype(compute_dtype)
        weight_normed = weight_normed.astype(compute_dtype)

    # Tile sizes: MXU/layout friendly (second-minor multiple of 8, minor
    # multiple of 128), shrunk to the (rounded-up) problem size.
    tm = _round_up(min(tm, _round_up(N, 8)), 8)
    tn = _round_up(min(tn, _round_up(C, 128)), 128)
    tk = _round_up(min(tk, _round_up(D, 128)), 128)
    Np, Cp, Dp = _round_up(N, tm), _round_up(C, tn), _round_up(D, tk)

    # Zero padding: padded rows/cols contribute nothing to the dot products.
    if (Np, Dp) != (N, D):
        x = jnp.pad(x, ((0, Np - N), (0, Dp - D)))
    if (Cp, Dp) != (C, D):
        weight_normed = jnp.pad(weight_normed, ((0, Cp - C), (0, Dp - D)))
    if Np != N:
        x_inv = jnp.pad(x_inv, ((0, Np - N), (0, 0)))

    grid = (Np // tm, Cp // tn, Dp // tk)
    out = pl.pallas_call(
        _cosine_matmul_kernel,
        out_shape=jax.ShapeDtypeStruct((Np, Cp), out_dtype),
        grid=grid,
        in_specs=[
            pl.BlockSpec(memory_space=pltpu.MemorySpace.SMEM),   # sigma (1,)
            pl.BlockSpec((tm, 1), lambda i, j, k: (i, 0)),       # 1/||x|| rows
            pl.BlockSpec((tm, tk), lambda i, j, k: (i, k)),      # X tile
            pl.BlockSpec((tn, tk), lambda i, j, k: (j, k)),      # W tile
        ],
        out_specs=pl.BlockSpec((tm, tn), lambda i, j, k: (i, j)),
        scratch_shapes=[pltpu.VMEM((tm, tn), jnp.float32)],
        compiler_params=pltpu.CompilerParams(
            dimension_semantics=("parallel", "parallel", "arbitrary"),
            vmem_limit_bytes=32 * 1024 * 1024,
        ),
    )(sigma.astype(jnp.float32), x_inv, x, weight_normed)
    return out[:N, :C]


# ---------------------------------------------------------------------------
# Kernel 2: top-k cosine selection (topk_indices branch)
#   sims[n,k] = <normalize(X[task_idx[n,k], n]), normalize(W)[topk[n,k]]>
#   label[n]  = topk[n, argmax_k sims[n,k]]
# No (N,K,D) gathers are materialized: the flattened row indices into
# X.reshape(T*N, D) and into the pre-normalized weight are scalar-prefetch
# args that drive data-dependent (1, D) row-gather BlockSpecs; an online max
# over the inner K axis keeps the argmax in-kernel.
# ---------------------------------------------------------------------------
def _topk_select_kernel(topk_ref, fidx_ref, x_row_ref, w_row_ref, label_ref,
                        best_sim, best_lab):
    del fidx_ref  # only used by the index_maps
    n = pl.program_id(0)
    k = pl.program_id(1)
    K = pl.num_programs(1)

    @pl.when(k == 0)
    def _init():
        best_sim[...] = jnp.full_like(best_sim, -jnp.inf)
        best_lab[...] = jnp.zeros_like(best_lab)

    x = x_row_ref[...].astype(jnp.float32)                     # (1, D)
    w = w_row_ref[...].astype(jnp.float32)                     # (1, D), unit norm
    inv = jax.lax.rsqrt(
        jnp.maximum(jnp.sum(x * x, axis=-1, keepdims=True), EPS2))   # (1, 1)
    sim = jnp.sum(x * w, axis=-1, keepdims=True) * inv          # (1, 1) cosine

    cand = jnp.full((1, 1), topk_ref[n * K + k], dtype=jnp.int32)
    better = sim > best_sim[...]        # strict ">" => first max wins (torch tie-break)
    best_lab[...] = jnp.where(better, cand, best_lab[...])
    best_sim[...] = jnp.where(better, sim, best_sim[...])

    @pl.when(k == K - 1)
    def _fin():
        # label output stays VMEM-resident for the whole grid (block index
        # constant); write the winning label for row n.
        label_ref[pl.ds(n, 1), :] = best_lab[...]


def topk_select(x2d, weight_normed, topk_flat, fidx_flat, N, K):
    """x2d: (T*N, D); weight_normed: (C, D); topk/fidx flattened (N*K,) int32."""
    D = x2d.shape[1]
    label = pl.pallas_call(
        _topk_select_kernel,
        out_shape=jax.ShapeDtypeStruct((N, 1), jnp.int32),
        grid_spec=pltpu.PrefetchScalarGridSpec(
            num_scalar_prefetch=2,                # topk_flat, fidx_flat -> SMEM
            grid=(N, K),
            in_specs=[
                # gather X row (task t, sample n) = row fidx[n*K+k] of (T*N, D)
                pl.BlockSpec((1, D),
                             lambda n, k, tkf, fxf: (fxf[n * K + k], 0)),
                # gather pre-normalized weight row topk[n*K+k] of (C, D)
                pl.BlockSpec((1, D),
                             lambda n, k, tkf, fxf: (tkf[n * K + k], 0)),
            ],
            # whole (N, 1) label array stays resident in VMEM across the grid
            out_specs=pl.BlockSpec((N, 1), lambda n, k, tkf, fxf: (0, 0)),
            scratch_shapes=[pltpu.VMEM((1, 1), jnp.float32),   # best similarity
                            pltpu.VMEM((1, 1), jnp.int32)],    # best label
        ),
        compiler_params=pltpu.CompilerParams(
            dimension_semantics=("arbitrary", "arbitrary"),
        ),
    )(topk_flat, fidx_flat, x2d, weight_normed)
    return label[:, 0]


# ---------------------------------------------------------------------------
# Module wrapper (parameter init mirrors reset_parameters)
# ---------------------------------------------------------------------------
class TopKCosineLinearPallas:
    def __init__(self, in_features, out_features, nb_proxy=1, sigma=True,
                 key=None):
        if key is None:
            key = jax.random.PRNGKey(0)
        self.in_features = in_features
        self.out_features = out_features * nb_proxy
        self.nb_proxy = nb_proxy
        stdv = 1.0 / math.sqrt(in_features)
        self.weight = jax.random.uniform(
            key, (self.out_features, in_features),
            minval=-stdv, maxval=stdv, dtype=jnp.float32)
        self.sigma = jnp.ones((1,), jnp.float32) if sigma else None
        # Weight is a parameter: L2-normalize once and cache (recompute if the
        # weight is ever updated) -- hoists the normalize off the hot path.
        self.weight_normed = _l2_normalize_rows(self.weight)

    def __call__(self, X, topk_indices=None, class_task_query=None):
        if topk_indices is None:
            sigma = (self.sigma if self.sigma is not None
                     else jnp.ones((1,), jnp.float32))
            out = cosine_linear(X, self.weight_normed, sigma)
            return {"logits": out}
        else:
            T, N, D = X.shape
            K = topk_indices.shape[1]
            topk_indices = topk_indices.astype(jnp.int32)
            # class_task_query is a user callback -> plain JAX glue (cheap, O(N*K))
            task_idx = class_task_query(topk_indices).astype(jnp.int32)      # (N, K)
            # row index into X.reshape(T*N, D) for (task t, sample n)
            flat_idx = (task_idx * N
                        + jnp.arange(N, dtype=jnp.int32)[:, None])           # (N, K)
            return topk_select(X.reshape(T * N, D), self.weight_normed,
                               topk_indices.reshape(-1), flat_idx.reshape(-1),
                               N, K)


# ---------------------------------------------------------------------------
if __name__ == "__main__":
    key = jax.random.PRNGKey(0)
    k_w, k_x1, k_x2, k_topk = jax.random.split(key, 4)

    in_features, out_features, nb_proxy = 256, 16, 1
    N, T, K = 24, 4, 4

    model = TopKCosineLinearPallas(in_features, out_features, nb_proxy,
                                   sigma=True, key=k_w)

    # ----- branch 1: plain cosine linear logits (default tiles) -----
    X1 = jax.random.normal(k_x1, (N, in_features), jnp.float32)
    logits = model(X1)["logits"]

    # same branch with small explicit tiles to exercise the multi-tile m/k
    # grid and the accumulator init/finalize path
    logits_tiled = cosine_linear(X1, model.weight_normed, model.sigma,
                                 tm=8, tn=128, tk=128)

    # ----- branch 2: top-k task-aware selection -----
    X2 = jax.random.normal(k_x2, (T, N, in_features), jnp.float32)
    topk = jax.random.randint(k_topk, (N, K), 0, model.out_features,
                              dtype=jnp.int32)
    classes_per_task = model.out_features // T

    def class_task_query(cls):
        return jnp.minimum(cls // classes_per_task, T - 1)

    labels = model(X2, topk, class_task_query)

    jax.block_until_ready((logits, logits_tiled, labels))

    # ----- pure-JAX reference checks -----
    def _norm(a, axis):
        return a / jnp.maximum(jnp.linalg.norm(a, axis=axis, keepdims=True), EPS)

    ref_logits = model.sigma[0] * (_norm(X1, 1) @ _norm(model.weight, 1).T)
    assert jnp.allclose(logits, ref_logits, atol=1e-5), "logits mismatch"
    assert jnp.allclose(logits_tiled, ref_logits, atol=1e-5), "tiled logits mismatch"

    task_idx = class_task_query(topk)
    tf = X2[task_idx, jnp.arange(N)[:, None], :]
    sw = _norm(model.weight, -1)[topk]
    sims = jnp.einsum("nkd,nkd->nk", _norm(tf, -1), sw)
    ref_labels = jnp.take_along_axis(
        topk, jnp.argmax(sims, axis=1)[:, None], axis=1)[:, 0]
    assert jnp.array_equal(labels, ref_labels), "labels mismatch"

    print("KERNEL_OK")
</pallas_src>

<mosaic_0001>
module attributes {stable_mosaic.version = 11 : i64} {
  func.func @_cosine_matmul_kernel(%arg0: i32, %arg1: i32, %arg2: i32, %arg3: memref<1xf32, #tpu.memory_space<smem>>, %arg4: memref<24x1xf32, #tpu.memory_space<vmem>>, %arg5: memref<24x256xf32, #tpu.memory_space<vmem>>, %arg6: memref<128x256xf32, #tpu.memory_space<vmem>>, %arg7: memref<24x128xf32, #tpu.memory_space<vmem>>, %arg8: memref<24x128xf32, #tpu.memory_space<vmem>>) attributes {dimension_semantics = [#tpu.dimension_semantics<parallel>, #tpu.dimension_semantics<parallel>, #tpu.dimension_semantics<arbitrary>], iteration_bounds = array<i64: 1, 1, 1>, scalar_prefetch = 0 : i64, scratch_operands = 1 : i64, tpu.core_type = #tpu.core_type<tc>, window_params = [{transform_indices = @transform_0, window_bounds = array<i64: 1>}, {transform_indices = @transform_1, window_bounds = array<i64: 24, 1>}, {transform_indices = @transform_2, window_bounds = array<i64: 24, 256>}, {transform_indices = @transform_3, window_bounds = array<i64: 128, 256>}, {transform_indices = @transform_4, window_bounds = array<i64: 24, 128>}]} {
    %c0_i32 = arith.constant 0 : i32
    %0 = arith.cmpi eq, %arg2, %c0_i32 : i32
    %1 = arith.extui %0 : i1 to i32
    %c0_i32_0 = arith.constant 0 : i32
    %2 = arith.cmpi ne, %1, %c0_i32_0 : i32
    scf.if %2 {
      %cst_10 = arith.constant 0.000000e+00 : f32
      %12 = vector.broadcast %cst_10 : f32 to vector<24x128xf32>
      %c0_11 = arith.constant 0 : index
      %c0_12 = arith.constant 0 : index
      %13 = vector.load %arg8[%c0_11, %c0_12] : memref<24x128xf32, #tpu.memory_space<vmem>>, vector<24x128xf32>
      tpu.vector_store %arg8[%c0_11, %c0_12], %12 {strides = array<i32>} : memref<24x128xf32, #tpu.memory_space<vmem>>, vector<24x128xf32>,
    } else {
    }
    %c0 = arith.constant 0 : index
    %c0_1 = arith.constant 0 : index
    %3 = vector.load %arg8[%c0, %c0_1] : memref<24x128xf32, #tpu.memory_space<vmem>>, vector<24x128xf32>
    %c0_2 = arith.constant 0 : index
    %c0_3 = arith.constant 0 : index
    %4 = vector.load %arg5[%c0_2, %c0_3] : memref<24x256xf32, #tpu.memory_space<vmem>>, vector<24x256xf32>
    %c0_4 = arith.constant 0 : index
    %c0_5 = arith.constant 0 : index
    %5 = vector.load %arg6[%c0_4, %c0_5] : memref<128x256xf32, #tpu.memory_space<vmem>>, vector<128x256xf32>
    %cst = arith.constant dense<0.000000e+00> : vector<24x128xf32>
    %6 = tpu.matmul %4, %5, %cst {dimension_numbers = #tpu.dot_dimension_numbers<[1], [1], [0], [0], [0, 0, 1, 0], [], []>} : vector<24x256xf32>, vector<128x256xf32>, vector<24x128xf32> -> vector<24x128xf32>
    %7 = arith.addf %3, %6 : vector<24x128xf32>
    %c0_6 = arith.constant 0 : index
    %c0_7 = arith.constant 0 : index
    %8 = vector.load %arg8[%c0_6, %c0_7] : memref<24x128xf32, #tpu.memory_space<vmem>>, vector<24x128xf32>
    tpu.vector_store %arg8[%c0_6, %c0_7], %7 {strides = array<i32>} : memref<24x128xf32, #tpu.memory_space<vmem>>, vector<24x128xf32>,
    %c0_i32_8 = arith.constant 0 : i32
    %9 = arith.cmpi eq, %arg2, %c0_i32_8 : i32
    %10 = arith.extui %9 : i1 to i32
    %c0_i32_9 = arith.constant 0 : i32
    %11 = arith.cmpi ne, %10, %c0_i32_9 : i32
    scf.if %11 {
      %c0_10 = arith.constant 0 : index
      %12 = memref.load %arg3[%c0_10] : memref<1xf32, #tpu.memory_space<smem>>
      %c0_11 = arith.constant 0 : index
      %c0_12 = arith.constant 0 : index
      %13 = vector.load %arg4[%c0_11, %c0_12] : memref<24x1xf32, #tpu.memory_space<vmem>>, vector<24x1xf32>
      %14 = vector.broadcast %12 : f32 to vector<24x1xf32>
      %15 = arith.mulf %14, %13 : vector<24x1xf32>
      %c0_13 = arith.constant 0 : index
      %c0_14 = arith.constant 0 : index
      %16 = vector.load %arg8[%c0_13, %c0_14] : memref<24x128xf32, #tpu.memory_space<vmem>>, vector<24x128xf32>
      %17 = vector.broadcast %15 : vector<24x1xf32> to vector<24x128xf32>
      %18 = arith.mulf %17, %16 : vector<24x128xf32>
      %c0_15 = arith.constant 0 : index
      %c0_16 = arith.constant 0 : index
      %19 = vector.load %arg7[%c0_15, %c0_16] : memref<24x128xf32, #tpu.memory_space<vmem>>, vector<24x128xf32>
      tpu.vector_store %arg7[%c0_15, %c0_16], %18 {strides = array<i32>} : memref<24x128xf32, #tpu.memory_space<vmem>>, vector<24x128xf32>,
    } else {
    }
    return
  }
  func.func @transform_0(%arg0: i32, %arg1: i32, %arg2: i32) -> i32 {
    %c0_i32 = arith.constant 0 : i32
    %c0_i32_0 = arith.constant 0 : i32
    return %c0_i32 : i32
  }
  func.func @transform_1(%arg0: i32, %arg1: i32, %arg2: i32) -> (i32, i32) {
    %c0_i32 = arith.constant 0 : i32
    %c0_i32_0 = arith.constant 0 : i32
    return %arg0, %c0_i32 : i32, i32
  }
  func.func @transform_2(%arg0: i32, %arg1: i32, %arg2: i32) -> (i32, i32) {
    %c0_i32 = arith.constant 0 : i32
    return %arg0, %arg2 : i32, i32
  }
  func.func @transform_3(%arg0: i32, %arg1: i32, %arg2: i32) -> (i32, i32) {
    %c0_i32 = arith.constant 0 : i32
    return %arg1, %arg2 : i32, i32
  }
  func.func @transform_4(%arg0: i32, %arg1: i32, %arg2: i32) -> (i32, i32) {
    %c0_i32 = arith.constant 0 : i32
    return %arg0, %arg1 : i32, i32
  }
}

</mosaic_0001>

<llo_original>
// kernel: tpu_custom_call.1
$region0: #{tpu_custom_call.1}
  #allocation0 [shape = 'u32[]', space=smem, size = 0x4, offset = 0x4, fixed_abs, tag = 'smem constant byte address 0x4 - core index']
  #allocation1 [shape = 'u32[144,128]{1,0:T(1,128)}', space=vmem, size = 0x12000, scoped, tag = 'internal scratch']
  #allocation2 [shape = 'f32[24,128]{1,0:T(8,128)}', space=vmem, size = 0x3000, scoped, tag = 'scratch operand']
  #allocation3 [shape = 'f32[1]{0:T(128)S(6)}', space=smem, size = 0x200, scoped, tag = 'scoped memory for tpu_custom_call.1']
  %s0 = inlined_call_operand.<no memory space> [shape: f32[1], index: 0, kind: input, shape index: {}]
  %s1 = inlined_call_operand.vmem [shape: f32[24,1], index: 1, kind: input, shape index: {}]
  %s2 = inlined_call_operand.hbm [shape: f32[24,256], index: 2, kind: input, shape index: {}]
  %s3 = inlined_call_operand.hbm [shape: f32[128,256], index: 3, kind: input, shape index: {}]
  %s4 = inlined_call_operand.hbm [shape: f32[24,128], index: 4, kind: output, shape index: {}]
  %s5 = sld [smem:[#allocation0]]
  $region42: #{tpu_custom_call.1} parent=0
    _
  %s7 = ssub.s32 1, %s5
  %s8 = scalar_select 0, %s7, %s5
  %9 = sst [smem:[#allocation3]] %s0
  $region1: #{tpu_custom_call.1} parent=0
    #allocation4 [shape = 'u8[24576]{0}', space=vmem, size = 0x6000, scoped, tag = 'input window, operand 2, single buffered']
    #allocation5 [shape = 's32[1]{0}', space=sflag, size = 0x4, scoped, tag = 'scoped memory for tpu_custom_call.1']
    #allocation6 [shape = 's32[1]{0}', space=sflag, size = 0x4, scoped, tag = 'scoped memory for tpu_custom_call.1']
    #allocation7 [shape = 'u8[131072]{0}', space=vmem, size = 0x20000, scoped, tag = 'input window, operand 3, single buffered']
    #allocation8 [shape = 's32[1]{0}', space=sflag, size = 0x4, scoped, tag = 'scoped memory for tpu_custom_call.1']
    #allocation9 [shape = 'u8[12288]{0}', space=vmem, size = 0x3000, scoped, tag = 'output window, operand 0, single buffered']
    %10 = vsyncpa [#allocation5], 0
    %11 = vsyncpa [#allocation8], 0
    %12 = vsyncpa [#allocation6], 0
    // Predicated region
    $region2: #{tpu_custom_call.1} parent=1 // pred_check
      _
    $region3: #{tpu_custom_call.1} parent=1 // pred_check_branch
      %14 = sbr.rel (0) target = $region5
    $region4: #{tpu_custom_call.1} parent=1 // pred_region
      _
    $region5: #{tpu_custom_call.1} parent=1 // pred_fallthru
      _
    // Predicated region
    $region6: #{tpu_custom_call.1} parent=1 // pred_check
      _
    $region7: #{tpu_custom_call.1} parent=1 // pred_check_branch
      %16 = sbr.rel (0) target = $region9
    $region8: #{tpu_custom_call.1} parent=1 // pred_region
      _
    $region9: #{tpu_custom_call.1} parent=1 // pred_fallthru
      _
    // Predicated region
    $region10: #{tpu_custom_call.1} parent=1 // pred_check
      _
    $region11: #{tpu_custom_call.1} parent=1 // pred_check_branch
      %18 = sbr.rel (0) target = $region13
    $region12: #{tpu_custom_call.1} parent=1 // pred_region
      %s20 = ssub.s32 768, 768
      %21 = vsyncadd [#allocation5], %s20
      %s22 = sshll.u32 [#allocation4], 4
      %s23 = int_to_ptr.vmem [resolvable:$true] %s22
      %28 = dma.hbm_to_vmem [thread:$0]  %s2, 768, %s23, [#allocation5], 256, 256, 16
    $region13: #{tpu_custom_call.1} parent=1 // pred_fallthru
      _
    // Predicated region
    $region14: #{tpu_custom_call.1} parent=1 // pred_check
      _
    $region15: #{tpu_custom_call.1} parent=1 // pred_check_branch
      %30 = sbr.rel (0) target = $region17
    $region16: #{tpu_custom_call.1} parent=1 // pred_region
      %s32 = ssub.s32 4096, 4096
      %33 = vsyncadd [#allocation8], %s32
      %s34 = sshll.u32 [#allocation7], 4
      %s35 = int_to_ptr.vmem [resolvable:$true] %s34
      %40 = dma.hbm_to_vmem [thread:$0]  %s3, 4096, %s35, [#allocation8], 256, 256, 16
    $region17: #{tpu_custom_call.1} parent=1 // pred_fallthru
      _
    // Predicated region
    $region18: #{tpu_custom_call.1} parent=1 // pred_check
      _
    $region19: #{tpu_custom_call.1} parent=1 // pred_check_branch
      %42 = sbr.rel (0) target = $region21
    $region20: #{tpu_custom_call.1} parent=1 // pred_region
      %43 = dma.done [#allocation5], 768
    $region21: #{tpu_custom_call.1} parent=1 // pred_fallthru
      _
    // Predicated region
    $region22: #{tpu_custom_call.1} parent=1 // pred_check
      _
    $region23: #{tpu_custom_call.1} parent=1 // pred_check_branch
      %45 = sbr.rel (0) target = $region25
    $region24: #{tpu_custom_call.1} parent=1 // pred_region
      %46 = dma.done [#allocation8], 4096
    $region25: #{tpu_custom_call.1} parent=1 // pred_fallthru
      _
    %p47 = scmp.eq.s32.totalorder 0, 0
    // Predicated region
    $region26: #{tpu_custom_call.1} parent=1 // pred_check
      %p48 = pneg %p47
    $region27: #{tpu_custom_call.1} parent=1 // pred_check_branch
      %50 = sbr.rel (%p48) target = $region29
    $region28: #{tpu_custom_call.1} parent=1 // pred_region
      %51 = vst [vmem:[#allocation2] sm:$0xff] 0.0
      %52 = vst [vmem:[#allocation2 + $0x8] sm:$0xff] 0.0
      %53 = vst [vmem:[#allocation2 + $0x10] sm:$0xff] 0.0
    $region29: #{tpu_custom_call.1} parent=1 // pred_fallthru
      _
    %v54 = vld [vmem:[#allocation2] sm:$0xff]
    %v55 = vld [vmem:[#allocation2 + $0x8] sm:$0xff]
    %v56 = vld [vmem:[#allocation2 + $0x10] sm:$0xff]
    %v57 = vld [vmem:[#allocation4] sm:$0xff]
    %v58 = vld [vmem:[#allocation4 + $0x8] sm:$0xff]
    %v59 = vld [vmem:[#allocation4 + $0x10] sm:$0xff]
    %v60 = vld [vmem:[#allocation4 + $0x18] sm:$0xff]
    %v61 = vld [vmem:[#allocation4 + $0x20] sm:$0xff]
    %v62 = vld [vmem:[#allocation4 + $0x28] sm:$0xff]
    %v63 = vld [vmem:[#allocation7] sm:$0xff]
    %v64 = vld [vmem:[#allocation7 + $0x8] sm:$0xff]
    %v65 = vld [vmem:[#allocation7 + $0x10] sm:$0xff]
    %v66 = vld [vmem:[#allocation7 + $0x18] sm:$0xff]
    %v67 = vld [vmem:[#allocation7 + $0x20] sm:$0xff]
    %v68 = vld [vmem:[#allocation7 + $0x28] sm:$0xff]
    %v69 = vld [vmem:[#allocation7 + $0x30] sm:$0xff]
    %v70 = vld [vmem:[#allocation7 + $0x38] sm:$0xff]
    %v71 = vld [vmem:[#allocation7 + $0x40] sm:$0xff]
    %v72 = vld [vmem:[#allocation7 + $0x48] sm:$0xff]
    %v73 = vld [vmem:[#allocation7 + $0x50] sm:$0xff]
    %v74 = vld [vmem:[#allocation7 + $0x58] sm:$0xff]
    %v75 = vld [vmem:[#allocation7 + $0x60] sm:$0xff]
    %v76 = vld [vmem:[#allocation7 + $0x68] sm:$0xff]
    %v77 = vld [vmem:[#allocation7 + $0x70] sm:$0xff]
    %v78 = vld [vmem:[#allocation7 + $0x78] sm:$0xff]
    %v79 = vld [vmem:[#allocation7 + $0x80] sm:$0xff]
    %v80 = vld [vmem:[#allocation7 + $0x88] sm:$0xff]
    %v81 = vld [vmem:[#allocation7 + $0x90] sm:$0xff]
    %v82 = vld [vmem:[#allocation7 + $0x98] sm:$0xff]
    %v83 = vld [vmem:[#allocation7 + $0xa0] sm:$0xff]
    %v84 = vld [vmem:[#allocation7 + $0xa8] sm:$0xff]
    %v85 = vld [vmem:[#allocation7 + $0xb0] sm:$0xff]
    %v86 = vld [vmem:[#allocation7 + $0xb8] sm:$0xff]
    %v87 = vld [vmem:[#allocation7 + $0xc0] sm:$0xff]
    %v88 = vld [vmem:[#allocation7 + $0xc8] sm:$0xff]
    %v89 = vld [vmem:[#allocation7 + $0xd0] sm:$0xff]
    %v90 = vld [vmem:[#allocation7 + $0xd8] sm:$0xff]
    %v91 = vld [vmem:[#allocation7 + $0xe0] sm:$0xff]
    %v92 = vld [vmem:[#allocation7 + $0xe8] sm:$0xff]
    %v93 = vld [vmem:[#allocation7 + $0xf0] sm:$0xff]
    %v94 = vld [vmem:[#allocation7 + $0xf8] sm:$0xff]
    %95 = vmatprep.subr.mxu0 %v94
    %96 = vmatpush1.xpose.msra.mxu0 %v93
    %97 = vmatprep.subr.mxu0 %v92
    %98 = vmatpush1.xpose.msra.mxu0 %v91
    %99 = vmatprep.subr.mxu0 %v90
    %100 = vmatpush1.xpose.msra.mxu0 %v89
    %101 = vmatprep.subr.mxu0 %v88
    %102 = vmatpush1.xpose.msra.mxu0 %v87
    %103 = vmatprep.subr.mxu0 %v86
    %104 = vmatpush1.xpose.msra.mxu0 %v85
    %105 = vmatprep.subr.mxu0 %v84
    %106 = vmatpush1.xpose.msra.mxu0 %v83
    %107 = vmatprep.subr.mxu0 %v82
    %108 = vmatpush1.xpose.msra.mxu0 %v81
    %109 = vmatprep.subr.mxu0 %v80
    %110 = vmatpush1.xpose.msra.mxu0 %v79
    %111 = vmatprep.subr.mxu0 %v78
    %112 = vmatpush1.xpose.msra.mxu0 %v77
    %113 = vmatprep.subr.mxu0 %v76
    %114 = vmatpush1.xpose.msra.mxu0 %v75
    %115 = vmatprep.subr.mxu0 %v74
    %116 = vmatpush1.xpose.msra.mxu0 %v73
    %117 = vmatprep.subr.mxu0 %v72
    %118 = vmatpush1.xpose.msra.mxu0 %v71
    %119 = vmatprep.subr.mxu0 %v70
    %120 = vmatpush1.xpose.msra.mxu0 %v69
    %121 = vmatprep.subr.mxu0 %v68
    %122 = vmatpush1.xpose.msra.mxu0 %v67
    %123 = vmatprep.subr.mxu0 %v66
    %124 = vmatpush1.xpose.msra.mxu0 %v65
    %125 = vmatprep.subr.mxu0 %v64
    %126 = vmatpush1.xpose.msra.mxu0 %v63
    %127 = vmatprep.subr.mxu0 0.0
    %128 = vmatpush2.xpose.msra.mxu0 0.0
    %129 = vmatprep.subr.mxu0 0.0
    %130 = vmatpush2.xpose.msra.mxu0 0.0
    %131 = vmatprep.subr.mxu0 0.0
    %132 = vmatpush2.xpose.msra.mxu0 0.0
    %133 = vmatprep.subr.mxu0 0.0
    %134 = vmatpush2.xpose.msra.mxu0 0.0
    %135 = vmatprep.subr.mxu0 0.0
    %136 = vmatpush2.xpose.msra.mxu0 0.0
    %137 = vmatprep.subr.mxu0 0.0
    %138 = vmatpush2.xpose.msra.mxu0 0.0
    %139 = vmatprep.subr.mxu0 0.0
    %140 = vmatpush2.xpose.msra.mxu0 0.0
    %141 = vmatprep.subr.mxu0 0.0
    %142 = vmatpush2.xpose.msra.mxu0 0.0
    %143 = vmatprep.subr.mxu0 0.0
    %144 = vmatpush2.xpose.msra.mxu0 0.0
    %145 = vmatprep.subr.mxu0 0.0
    %146 = vmatpush2.xpose.msra.mxu0 0.0
    %147 = vmatprep.subr.mxu0 0.0
    %148 = vmatpush2.xpose.msra.mxu0 0.0
    %149 = vmatprep.subr.mxu0 0.0
    %150 = vmatpush2.xpose.msra.mxu0 0.0
    %151 = vmatprep.subr.mxu0 0.0
    %152 = vmatpush2.xpose.msra.mxu0 0.0
    %153 = vmatprep.subr.mxu0 0.0
    %154 = vmatpush2.xpose.msra.mxu0 0.0
    %155 = vmatprep.subr.mxu0 0.0
    %156 = vmatpush2.xpose.msra.mxu0 0.0
    %157 = vmatprep.subr.mxu0 0.0
    %158 = vmatpush2.xpose.msra.mxu0 0.0
    %159 = vmatprep.mubr.f32.mxu0 %v58
    %160 = vmatmul.mubr.f32.gmra.mxu0 %v57
    %v161 = vpop.f32.mrf.mxu0
    %v162 = vadd.f32 0.0, %v161
    %v163 = vpop.f32.mrf.mxu0
    %164 = vmatprep.mubr.f32.mxu0 %v60
    %165 = vmatmul.mubr.f32.gmra.mxu0 %v59
    %v166 = vpop.f32.mrf.mxu0
    %v167 = vadd.f32 0.0, %v166
    %v168 = vpop.f32.mrf.mxu0
    %169 = vmatprep.mubr.f32.mxu0 %v62
    %170 = vmatmul.mubr.f32.gmra.mxu0 %v61
    %v171 = vpop.f32.mrf.mxu0
    %v172 = vadd.f32 0.0, %v171
    %v173 = vpop.f32.mrf.mxu0
    %174 = vdwg.mxu0
    %v175 = vadd.f32 %v54, %v162
    %v176 = vadd.f32 %v55, %v167
    %v177 = vadd.f32 %v56, %v172
    %178 = vst [vmem:[#allocation2] sm:$0xff] %v175
    %179 = vst [vmem:[#allocation2 + $0x8] sm:$0xff] %v176
    %180 = vst [vmem:[#allocation2 + $0x10] sm:$0xff] %v177
    // Predicated region
    $region30: #{tpu_custom_call.1} parent=1 // pred_check
      %p181 = pneg %p47
    $region31: #{tpu_custom_call.1} parent=1 // pred_check_branch
      %183 = sbr.rel (%p181) target = $region33
    $region32: #{tpu_custom_call.1} parent=1 // pred_region
      %s184 = sld [smem:[#allocation3]]
      %v185 = vld [vmem:[%s1] sm:$0xff]
      %v186 = vld [vmem:[%s1 + $0x8] sm:$0xff]
      %v187 = vld [vmem:[%s1 + $0x10] sm:$0xff]
      %v188 = vstv %s184
      %v189 = vmul.f32 %v188, %v185
      %v190 = vmul.f32 %v188, %v186
      %v191 = vmul.f32 %v188, %v187
      %v192 = vld [vmem:[#allocation2] sm:$0xff]
      %v193 = vld [vmem:[#allocation2 + $0x8] sm:$0xff]
      %v194 = vld [vmem:[#allocation2 + $0x10] sm:$0xff]
      %196 = vset.pattern.permute.xlu0 0
      %197 = vperm.xlu0 %196, %v189
      %v198 = vpop.permute.xlu0 %197
      %201 = vset.pattern.permute.xlu0 0
      %202 = vperm.xlu0 %201, %v190
      %v203 = vpop.permute.xlu0 %202
      %206 = vset.pattern.permute.xlu0 0
      %207 = vperm.xlu0 %206, %v191
      %v208 = vpop.permute.xlu0 %207
      %v210 = vmul.f32 %v198, %v192
      %v211 = vmul.f32 %v203, %v193
      %v212 = vmul.f32 %v208, %v194
      %213 = vst [vmem:[#allocation9] sm:$0xff] %v210
      %214 = vst [vmem:[#allocation9 + $0x8] sm:$0xff] %v211
      %215 = vst [vmem:[#allocation9 + $0x10] sm:$0xff] %v212
    $region33: #{tpu_custom_call.1} parent=1 // pred_fallthru
      _
    // Predicated region
    $region34: #{tpu_custom_call.1} parent=1 // pred_check
      _
    $region35: #{tpu_custom_call.1} parent=1 // pred_check_branch
      %217 = sbr.rel (0) target = $region37
    $region36: #{tpu_custom_call.1} parent=1 // pred_region
      %s219 = ssub.s32 384, 384
      %220 = vsyncadd [#allocation6], %s219
      %s221 = sshll.u32 [#allocation9], 4
      %s222 = int_to_ptr.vmem [resolvable:$true] %s221
      %227 = dma.vmem_to_hbm [thread:$0]  %s222, 384, %s4, [#allocation6], 128, 128, 8
    $region37: #{tpu_custom_call.1} parent=1 // pred_fallthru
      _
    // Predicated region
    $region38: #{tpu_custom_call.1} parent=1 // pred_check
      _
    $region39: #{tpu_custom_call.1} parent=1 // pred_check_branch
      %229 = sbr.rel (0) target = $region41
    $region40: #{tpu_custom_call.1} parent=1 // pred_region
      %230 = dma.done [#allocation6], 384
    $region41: #{tpu_custom_call.1} parent=1 // pred_fallthru
      _
    %231 = vsyncpa [#allocation5], 1
    %232 = vsyncpa [#allocation8], 1
    %233 = vsyncpa [#allocation6], 1

</llo_original>
